<compile_context>
chip_gen: v5e
topology: v5e:2x2
jax: 0.10.0
libtpu: 0.0.40
codegen_flags: <defaults>
</compile_context>

<pallas_src>
import functools

import jax
import jax.numpy as jnp
from jax.experimental import pallas as pl
from jax.experimental.pallas import tpu as pltpu

LANES = 128


def _cdiv(a, b):
    return (a + b - 1) // b


def _round_up(a, m):
    return _cdiv(a, m) * m


def _quantile_loss_kernel(x_ref, t_ref, loss_acc_ref, tgt_acc_ref,
                          *, quantile, use_square):
    b = pl.program_id(1)  # reduction axis (innermost)

    @pl.when(b == 0)
    def _():
        loss_acc_ref[...] = jnp.zeros_like(loss_acc_ref)
        tgt_acc_ref[...] = jnp.zeros_like(tgt_acc_ref)

    x = x_ref[...].astype(jnp.float32)
    t = t_ref[...].astype(jnp.float32)
    if use_square:
        x = x * x
    diff = x - t
    # q * max(-diff, 0) + (1 - q) * max(diff, 0)  ==  where(diff < 0, -q*diff, (1-q)*diff)
    loss = jnp.where(diff < 0, (-quantile) * diff, (1.0 - quantile) * diff)

    # Pure vreg-wise adds: fold (block_rows, 128) -> (block_rows//8, 8, 128)
    # and sum the leading axis into the resident (8, 128) accumulators.
    loss_acc_ref[...] += loss.reshape(-1, 8, LANES).sum(axis=0)
    tgt_acc_ref[...] += t.reshape(-1, 8, LANES).sum(axis=0)


def quantile_loss(inp, target, quantile=0.85, *, y_norm=True,
                  size_average=True, use_square=True,
                  block_rows=2048, num_parallel=2):
    assert inp.shape == target.shape
    n_elems = inp.size
    in_bytes = inp.dtype.itemsize + target.dtype.itemsize

    # Flatten in native dtype (no f32 materialization in HBM).
    x_flat = jnp.ravel(inp)
    t_flat = jnp.ravel(target)

    rows = _cdiv(n_elems, LANES)
    block_rows = max(8, min(int(block_rows), _round_up(rows, 8)))
    num_blocks = _cdiv(rows, block_rows)

    # Megacore split (v7x): leading "parallel" axis when the block count allows.
    if num_blocks >= 2 and num_blocks % num_parallel == 0:
        P = int(num_parallel)
    else:
        P = 1
    B = num_blocks // P

    padded = num_blocks * block_rows * LANES
    pad = padded - n_elems
    if pad:  # ragged tail only; zeros contribute 0 loss / 0 target sum
        x_flat = jnp.pad(x_flat, (0, pad))
        t_flat = jnp.pad(t_flat, (0, pad))
    x2d = x_flat.reshape(num_blocks * block_rows, LANES)
    t2d = t_flat.reshape(num_blocks * block_rows, LANES)

    kernel = functools.partial(_quantile_loss_kernel,
                               quantile=float(quantile),
                               use_square=bool(use_square))

    in_map = lambda p, b: (p * B + b, 0)
    out_map = lambda p, b: (p, 0)

    loss_part, tgt_part = pl.pallas_call(
        kernel,
        out_shape=(jax.ShapeDtypeStruct((P * 8, LANES), jnp.float32),
                   jax.ShapeDtypeStruct((P * 8, LANES), jnp.float32)),
        grid_spec=pltpu.PrefetchScalarGridSpec(
            num_scalar_prefetch=0,
            grid=(P, B),
            in_specs=[
                pl.BlockSpec((block_rows, LANES), in_map),
                pl.BlockSpec((block_rows, LANES), in_map),
            ],
            out_specs=[
                pl.BlockSpec((8, LANES), out_map),
                pl.BlockSpec((8, LANES), out_map),
            ],
        ),
        compiler_params=pltpu.CompilerParams(
            dimension_semantics=("parallel", "arbitrary")),
        cost_estimate=pl.CostEstimate(
            flops=8 * n_elems,
            transcendentals=0,
            bytes_accessed=n_elems * in_bytes + 2 * P * 8 * LANES * 4),
    )(x2d, t2d)

    # Tiny final collapse + scalar glue in plain JAX.
    loss_sum = jnp.sum(loss_part)
    tgt_sum = jnp.sum(tgt_part)

    if y_norm:
        loss_sum = loss_sum / jnp.maximum(1.0, tgt_sum)
    if size_average:
        return loss_sum / jnp.float32(n_elems)
    return loss_sum


def _reference(inp, target, quantile=0.85, *, y_norm=True,
               size_average=True, use_square=True):
    x = inp.astype(jnp.float32)
    t = target.astype(jnp.float32)
    if use_square:
        x = x ** 2
    diff = x - t
    loss = (quantile * jnp.maximum(-diff, 0.0)
            + (1.0 - quantile) * jnp.maximum(diff, 0.0))
    if y_norm:
        loss = loss / jnp.maximum(1.0, jnp.sum(t))
    return jnp.mean(loss) if size_average else jnp.sum(loss)


if __name__ == "__main__":
    key = jax.random.PRNGKey(0)
    k1, k2 = jax.random.split(key)
    # NCHW-shaped inputs (torch harness uses torch.rand -> uniform [0, 1)).
    x = jax.random.uniform(k1, (2, 4, 16, 16), dtype=jnp.float32)
    y = jax.random.uniform(k2, (2, 4, 16, 16), dtype=jnp.float32)

    out = quantile_loss(x, y, quantile=0.85)
    out = jax.block_until_ready(out)

    ref = _reference(x, y, quantile=0.85)
    # rtol accounts for f32 reduction-order differences between the tiled
    # kernel accumulation and XLA's monolithic reduce.
    assert jnp.allclose(out, ref, rtol=1e-4, atol=1e-7), (out, ref)
    print("KERNEL_OK")
</pallas_src>

<mosaic_0001>
module attributes {stable_mosaic.version = 11 : i64} {
  func.func @_quantile_loss_kernel(%arg0: i32, %arg1: i32, %arg2: memref<16x128xf32, #tpu.memory_space<vmem>>, %arg3: memref<16x128xf32, #tpu.memory_space<vmem>>, %arg4: memref<8x128xf32, #tpu.memory_space<vmem>>, %arg5: memref<8x128xf32, #tpu.memory_space<vmem>>) attributes {dimension_semantics = [#tpu.dimension_semantics<parallel>, #tpu.dimension_semantics<arbitrary>], iteration_bounds = array<i64: 1, 1>, scalar_prefetch = 0 : i64, scratch_operands = 0 : i64, tpu.core_type = #tpu.core_type<tc>, window_params = [{transform_indices = @transform_0, window_bounds = array<i64: 16, 128>}, {transform_indices = @transform_1, window_bounds = array<i64: 16, 128>}, {transform_indices = @transform_2, window_bounds = array<i64: 8, 128>}, {transform_indices = @transform_3, window_bounds = array<i64: 8, 128>}]} {
    %c0_i32 = arith.constant 0 : i32
    %0 = arith.cmpi eq, %arg1, %c0_i32 : i32
    %1 = arith.extui %0 : i1 to i32
    %c0_i32_0 = arith.constant 0 : i32
    %2 = arith.cmpi ne, %1, %c0_i32_0 : i32
    scf.if %2 {
      %cst_16 = arith.constant 0.000000e+00 : f32
      %24 = vector.broadcast %cst_16 : f32 to vector<8x128xf32>
      %c0_17 = arith.constant 0 : index
      %c0_18 = arith.constant 0 : index
      %25 = vector.load %arg4[%c0_17, %c0_18] : memref<8x128xf32, #tpu.memory_space<vmem>>, vector<8x128xf32>
      tpu.vector_store %arg4[%c0_17, %c0_18], %24 {strides = array<i32>} : memref<8x128xf32, #tpu.memory_space<vmem>>, vector<8x128xf32>,
      %cst_19 = arith.constant 0.000000e+00 : f32
      %26 = vector.broadcast %cst_19 : f32 to vector<8x128xf32>
      %c0_20 = arith.constant 0 : index
      %c0_21 = arith.constant 0 : index
      %27 = vector.load %arg5[%c0_20, %c0_21] : memref<8x128xf32, #tpu.memory_space<vmem>>, vector<8x128xf32>
      tpu.vector_store %arg5[%c0_20, %c0_21], %26 {strides = array<i32>} : memref<8x128xf32, #tpu.memory_space<vmem>>, vector<8x128xf32>,
    } else {
    }
    %c0 = arith.constant 0 : index
    %c0_1 = arith.constant 0 : index
    %3 = vector.load %arg2[%c0, %c0_1] : memref<16x128xf32, #tpu.memory_space<vmem>>, vector<16x128xf32>
    %c0_2 = arith.constant 0 : index
    %c0_3 = arith.constant 0 : index
    %4 = vector.load %arg3[%c0_2, %c0_3] : memref<16x128xf32, #tpu.memory_space<vmem>>, vector<16x128xf32>
    %5 = arith.mulf %3, %3 : vector<16x128xf32>
    %6 = arith.subf %5, %4 : vector<16x128xf32>
    %cst = arith.constant 0.000000e+00 : f32
    %7 = vector.broadcast %cst : f32 to vector<16x128xf32>
    %8 = arith.cmpf olt, %6, %7 : vector<16x128xf32>
    %cst_4 = arith.constant -8.500000e-01 : f32
    %9 = vector.broadcast %cst_4 : f32 to vector<16x128xf32>
    %10 = arith.mulf %9, %6 : vector<16x128xf32>
    %cst_5 = arith.constant 1.500000e-01 : f32
    %11 = vector.broadcast %cst_5 : f32 to vector<16x128xf32>
    %12 = arith.mulf %11, %6 : vector<16x128xf32>
    %13 = arith.select %8, %10, %12 : vector<16x128xi1>, vector<16x128xf32>
    %c0_6 = arith.constant 0 : index
    %c0_7 = arith.constant 0 : index
    %14 = vector.load %arg4[%c0_6, %c0_7] : memref<8x128xf32, #tpu.memory_space<vmem>>, vector<8x128xf32>
    %15 = vector.shape_cast %13 : vector<16x128xf32> to vector<2x8x128xf32>
    %cst_8 = arith.constant dense<0.000000e+00> : vector<8x128xf32>
    %16 = vector.multi_reduction <add>, %15, %cst_8 [0] : vector<2x8x128xf32> to vector<8x128xf32>
    %17 = arith.addf %14, %16 : vector<8x128xf32>
    %c0_9 = arith.constant 0 : index
    %c0_10 = arith.constant 0 : index
    %18 = vector.load %arg4[%c0_9, %c0_10] : memref<8x128xf32, #tpu.memory_space<vmem>>, vector<8x128xf32>
    tpu.vector_store %arg4[%c0_9, %c0_10], %17 {strides = array<i32>} : memref<8x128xf32, #tpu.memory_space<vmem>>, vector<8x128xf32>,
    %c0_11 = arith.constant 0 : index
    %c0_12 = arith.constant 0 : index
    %19 = vector.load %arg5[%c0_11, %c0_12] : memref<8x128xf32, #tpu.memory_space<vmem>>, vector<8x128xf32>
    %20 = vector.shape_cast %4 : vector<16x128xf32> to vector<2x8x128xf32>
    %cst_13 = arith.constant dense<0.000000e+00> : vector<8x128xf32>
    %21 = vector.multi_reduction <add>, %20, %cst_13 [0] : vector<2x8x128xf32> to vector<8x128xf32>
    %22 = arith.addf %19, %21 : vector<8x128xf32>
    %c0_14 = arith.constant 0 : index
    %c0_15 = arith.constant 0 : index
    %23 = vector.load %arg5[%c0_14, %c0_15] : memref<8x128xf32, #tpu.memory_space<vmem>>, vector<8x128xf32>
    tpu.vector_store %arg5[%c0_14, %c0_15], %22 {strides = array<i32>} : memref<8x128xf32, #tpu.memory_space<vmem>>, vector<8x128xf32>,
    return
  }
  func.func @transform_0(%arg0: i32, %arg1: i32) -> (i32, i32) {
    %c1_i32 = arith.constant 1 : i32
    %0 = arith.muli %arg0, %c1_i32 : i32
    %1 = arith.addi %0, %arg1 : i32
    %c0_i32 = arith.constant 0 : i32
    %c0_i32_0 = arith.constant 0 : i32
    return %1, %c0_i32 : i32, i32
  }
  func.func @transform_1(%arg0: i32, %arg1: i32) -> (i32, i32) {
    %c1_i32 = arith.constant 1 : i32
    %0 = arith.muli %arg0, %c1_i32 : i32
    %1 = arith.addi %0, %arg1 : i32
    %c0_i32 = arith.constant 0 : i32
    %c0_i32_0 = arith.constant 0 : i32
    return %1, %c0_i32 : i32, i32
  }
  func.func @transform_2(%arg0: i32, %arg1: i32) -> (i32, i32) {
    %c0_i32 = arith.constant 0 : i32
    %c0_i32_0 = arith.constant 0 : i32
    return %arg0, %c0_i32 : i32, i32
  }
  func.func @transform_3(%arg0: i32, %arg1: i32) -> (i32, i32) {
    %c0_i32 = arith.constant 0 : i32
    %c0_i32_0 = arith.constant 0 : i32
    return %arg0, %c0_i32 : i32, i32
  }
}

</mosaic_0001>

<llo_original>
// kernel: tpu_custom_call.1
$region0: #{tpu_custom_call.1}
  #allocation0 [shape = 'u32[]', space=smem, size = 0x4, offset = 0x4, fixed_abs, tag = 'smem constant byte address 0x4 - core index']
  #allocation1 [shape = 'u32[72,128]{1,0:T(1,128)}', space=vmem, size = 0x9000, scoped, tag = 'internal scratch']
  %s0 = inlined_call_operand.hbm [shape: f32[16,128], index: 0, kind: input, shape index: {}]
  %s1 = inlined_call_operand.hbm [shape: f32[16,128], index: 1, kind: input, shape index: {}]
  %s2 = inlined_call_operand.hbm [shape: f32[8,128], index: 2, kind: output, shape index: {0}]
  %s3 = inlined_call_operand.hbm [shape: f32[8,128], index: 3, kind: output, shape index: {1}]
  %4 = xla_tuple %s2, %s3
  %s5 = sld [smem:[#allocation0]]
  $region38: #{tpu_custom_call.1} parent=0
    _
  %s7 = ssub.s32 1, %s5
  %s8 = scalar_select 0, %s7, %s5
  $region1: #{tpu_custom_call.1} parent=0
    #allocation2 [shape = 'u8[8192]{0}', space=vmem, size = 0x2000, scoped, tag = 'input window, operand 0, single buffered']
    #allocation3 [shape = 's32[1]{0}', space=sflag, size = 0x4, scoped, tag = 'scoped memory for tpu_custom_call.1']
    #allocation4 [shape = 's32[1]{0}', space=sflag, size = 0x4, scoped, tag = 'scoped memory for tpu_custom_call.1']
    #allocation5 [shape = 'u8[8192]{0}', space=vmem, size = 0x2000, scoped, tag = 'input window, operand 1, single buffered']
    #allocation6 [shape = 's32[1]{0}', space=sflag, size = 0x4, scoped, tag = 'scoped memory for tpu_custom_call.1']
    #allocation7 [shape = 'u8[4096]{0}', space=vmem, size = 0x1000, scoped, tag = 'output window, operand 0, single buffered']
    #allocation8 [shape = 'u8[4096]{0}', space=vmem, size = 0x1000, scoped, tag = 'output window, operand 1, single buffered']
    #allocation9 [shape = 's32[1]{0}', space=sflag, size = 0x4, scoped, tag = 'scoped memory for tpu_custom_call.1']
    %9 = vsyncpa [#allocation3], 0
    %10 = vsyncpa [#allocation6], 0
    %11 = vsyncpa [#allocation4], 0
    %12 = vsyncpa [#allocation9], 0
    // Predicated region
    $region2: #{tpu_custom_call.1} parent=1 // pred_check
      _
    $region3: #{tpu_custom_call.1} parent=1 // pred_check_branch
      %14 = sbr.rel (0) target = $region5
    $region4: #{tpu_custom_call.1} parent=1 // pred_region
      %s15 = sadd.s32 0, 0
      %s16 = smul.u32 2, %s15
      %18 = vsyncadd [#allocation3], 0
      %s19 = smul.addr %s16, 8
      %s20 = scalar_lea.hbm %s0, %s19
      %s21 = sshll.u32 %s20, 4
      %s22 = int_to_ptr.hbm [resolvable:$true] %s21
      %s23 = sshll.u32 [#allocation2], 4
      %s24 = int_to_ptr.vmem [resolvable:$true] %s23
      %29 = dma.hbm_to_vmem [thread:$0]  %s22, 256, %s24, [#allocation3], 128, 128, 8
    $region5: #{tpu_custom_call.1} parent=1 // pred_fallthru
      _
    // Predicated region
    $region6: #{tpu_custom_call.1} parent=1 // pred_check
      _
    $region7: #{tpu_custom_call.1} parent=1 // pred_check_branch
      %31 = sbr.rel (0) target = $region9
    $region8: #{tpu_custom_call.1} parent=1 // pred_region
      %s32 = sadd.s32 0, 0
      %s33 = smul.u32 2, %s32
      %35 = vsyncadd [#allocation6], 0
      %s36 = smul.addr %s33, 8
      %s37 = scalar_lea.hbm %s1, %s36
      %s38 = sshll.u32 %s37, 4
      %s39 = int_to_ptr.hbm [resolvable:$true] %s38
      %s40 = sshll.u32 [#allocation5], 4
      %s41 = int_to_ptr.vmem [resolvable:$true] %s40
      %46 = dma.hbm_to_vmem [thread:$0]  %s39, 256, %s41, [#allocation6], 128, 128, 8
    $region9: #{tpu_custom_call.1} parent=1 // pred_fallthru
      _
    // Predicated region
    $region10: #{tpu_custom_call.1} parent=1 // pred_check
      _
    $region11: #{tpu_custom_call.1} parent=1 // pred_check_branch
      %48 = sbr.rel (0) target = $region13
    $region12: #{tpu_custom_call.1} parent=1 // pred_region
      %50 = dma.done [#allocation3], 256
    $region13: #{tpu_custom_call.1} parent=1 // pred_fallthru
      _
    // Predicated region
    $region14: #{tpu_custom_call.1} parent=1 // pred_check
      _
    $region15: #{tpu_custom_call.1} parent=1 // pred_check_branch
      %52 = sbr.rel (0) target = $region17
    $region16: #{tpu_custom_call.1} parent=1 // pred_region
      %54 = dma.done [#allocation6], 256
    $region17: #{tpu_custom_call.1} parent=1 // pred_fallthru
      _
    %s55 = sadd.s32 0, 0
    %s56 = smul.u32 2, %s55
    %s57 = sadd.s32 0, 0
    %s58 = smul.u32 2, %s57
    %p59 = scmp.eq.s32.totalorder 0, 0
    // Predicated region
    $region18: #{tpu_custom_call.1} parent=1 // pred_check
      %p60 = pneg %p59
    $region19: #{tpu_custom_call.1} parent=1 // pred_check_branch
      %62 = sbr.rel (%p60) target = $region21
    $region20: #{tpu_custom_call.1} parent=1 // pred_region
      %63 = vst [vmem:[#allocation7] sm:$0xff] 0.0
      %64 = vst [vmem:[#allocation8] sm:$0xff] 0.0
    $region21: #{tpu_custom_call.1} parent=1 // pred_fallthru
      _
    %v65 = vld [vmem:[#allocation2] sm:$0xff]
    %v66 = vld [vmem:[#allocation2 + $0x8] sm:$0xff]
    %v67 = vld [vmem:[#allocation5] sm:$0xff]
    %v68 = vld [vmem:[#allocation5 + $0x8] sm:$0xff]
    %v69 = vmul.f32 %v65, %v65
    %v70 = vmul.f32 %v66, %v66
    %v71 = vsub.f32 %v69, %v67
    %v72 = vsub.f32 %v70, %v68
    %vm73 = vcmp.lt.f32.partialorder %v71, 0.0
    %vm74 = vcmp.lt.f32.partialorder %v72, 0.0
    %v75 = vmul.f32 %v71, -0.85
    %v76 = vmul.f32 %v72, -0.85
    %v77 = vmul.f32 %v71, 0.15
    %v78 = vmul.f32 %v72, 0.15
    %v79 = vsel %vm73, %v75, %v77
    %v80 = vsel %vm74, %v76, %v78
    %v81 = vld [vmem:[#allocation7] sm:$0xff]
    %v82 = vadd.f32 %v79, %v80
    %v83 = vadd.f32 %v81, %v82
    %84 = vst [vmem:[#allocation7] sm:$0xff] %v83
    %v85 = vld [vmem:[#allocation8] sm:$0xff]
    %v86 = vadd.f32 %v67, %v68
    %v87 = vadd.f32 %v85, %v86
    %88 = vst [vmem:[#allocation8] sm:$0xff] %v87
    // Predicated region
    $region22: #{tpu_custom_call.1} parent=1 // pred_check
      _
    $region23: #{tpu_custom_call.1} parent=1 // pred_check_branch
      %90 = sbr.rel (0) target = $region25
    $region24: #{tpu_custom_call.1} parent=1 // pred_region
      %92 = vsyncadd [#allocation4], 0
      %s94 = sshll.u32 [#allocation7], 4
      %s95 = int_to_ptr.vmem [resolvable:$true] %s94
      %s96 = sshll.u32 %s2, 4
      %s97 = int_to_ptr.hbm [resolvable:$true] %s96
      %99 = dma.vmem_to_hbm [thread:$0]  %s95, 128, %s97, [#allocation4]
    $region25: #{tpu_custom_call.1} parent=1 // pred_fallthru
      _
    // Predicated region
    $region26: #{tpu_custom_call.1} parent=1 // pred_check
      _
    $region27: #{tpu_custom_call.1} parent=1 // pred_check_branch
      %101 = sbr.rel (0) target = $region29
    $region28: #{tpu_custom_call.1} parent=1 // pred_region
      %103 = vsyncadd [#allocation9], 0
      %s105 = sshll.u32 [#allocation8], 4
      %s106 = int_to_ptr.vmem [resolvable:$true] %s105
      %s107 = sshll.u32 %s3, 4
      %s108 = int_to_ptr.hbm [resolvable:$true] %s107
      %110 = dma.vmem_to_hbm [thread:$0]  %s106, 128, %s108, [#allocation9]
    $region29: #{tpu_custom_call.1} parent=1 // pred_fallthru
      _
    // Predicated region
    $region30: #{tpu_custom_call.1} parent=1 // pred_check
      _
    $region31: #{tpu_custom_call.1} parent=1 // pred_check_branch
      %112 = sbr.rel (0) target = $region33
    $region32: #{tpu_custom_call.1} parent=1 // pred_region
      %114 = dma.done [#allocation4], 128
    $region33: #{tpu_custom_call.1} parent=1 // pred_fallthru
      _
    // Predicated region
    $region34: #{tpu_custom_call.1} parent=1 // pred_check
      _
    $region35: #{tpu_custom_call.1} parent=1 // pred_check_branch
      %116 = sbr.rel (0) target = $region37
    $region36: #{tpu_custom_call.1} parent=1 // pred_region
      %118 = dma.done [#allocation9], 128
    $region37: #{tpu_custom_call.1} parent=1 // pred_fallthru
      _
    %119 = vsyncpa [#allocation3], 1
    %120 = vsyncpa [#allocation6], 1
    %121 = vsyncpa [#allocation4], 1
    %122 = vsyncpa [#allocation9], 1

</llo_original>
